<compile_context>
chip_gen: v7x
topology: tpu7x:2x2x1
jax: 0.10.0
libtpu: 0.0.40
codegen_flags: <defaults>
</compile_context>

<pallas_src>
import jax
import jax.numpy as jnp
from jax import lax
from jax.experimental import pallas as pl
from jax.experimental.pallas import tpu as pltpu

EPS = 1e-5
# nn.LeakyReLU(True): first positional arg is negative_slope, True == 1.0.
NEG_SLOPE = 1.0


def _round_up(v, m):
    return ((v + m - 1) // m) * m


# --------------------------------------------------------------------------
# pltpu.roll shift-convention probe (run once, EAGERLY -- warmed in __main__
# before any jitted call so it never executes under a trace).
# --------------------------------------------------------------------------
_ROLL_FORWARD = None


def _roll_is_forward():
    """True iff pltpu.roll follows np.roll semantics (result[i] = x[i-shift])."""
    global _ROLL_FORWARD
    if _ROLL_FORWARD is None:
        def probe(x_ref, o_ref):
            o_ref[...] = pltpu.roll(x_ref[...], 1, axis=1)

        x = lax.broadcasted_iota(jnp.int32, (8, 128), 1)
        out = pl.pallas_call(
            probe, out_shape=jax.ShapeDtypeStruct((8, 128), jnp.int32))(x)
        _ROLL_FORWARD = bool(int(out[0, 1]) == 0)
    return _ROLL_FORWARD


def _left_shift_amount(k, length):
    """pltpu.roll shift that maps lane i+k -> lane i (left shift by k lanes)."""
    if k == 0:
        return 0
    return (length - k) % length if _roll_is_forward() else k


# --------------------------------------------------------------------------
# VMEM budgeting (review items 5/6): generation-aware via get_tpu_info().
# --------------------------------------------------------------------------
def _vmem_budget_bytes():
    cap = 64 * 2 ** 20                       # smallest physical VMEM (v7x/TC)
    try:
        cap = int(pltpu.get_tpu_info().vmem_capacity_bytes)
    except Exception:
        pass
    return max(8 * 2 ** 20, int(cap * 0.4))  # leave headroom for the compiler


def _pick_nb(N, per_sample_bytes, fixed_bytes, budget_bytes, mixed_rate):
    """Samples per grid step: prefer >=4 grid steps (>=2 per v7x TensorCore,
    even split), stay inside the VMEM budget, avoid sample padding.  Broadcast
    (reduced-rate) inputs force Nb == 1 so their block index is constant
    within a step (review item 7 + mixed-rate concat fusion)."""
    if mixed_rate or N <= 1:
        return 1
    divisors = [d for d in range(1, N + 1)
                if N % d == 0 and fixed_bytes + d * per_sample_bytes <= budget_bytes]
    if not divisors:
        return 1
    for min_steps in (4, 2, 1):
        cand = [d for d in divisors if N // d >= min_steps]
        if cand:
            return max(cand)
    return 1


# --------------------------------------------------------------------------
# Fused Conv2d('same', stride 1) + InstanceNorm2d + LeakyReLU(1.0) kernel.
# Per sample: x_j laid out lane-dense as (Cin_j_p, Lsrc_pad) (zero-padded,
# spatially flattened with padded row stride Wp); every conv tap is a constant
# lane shift, so the shifted slices are stacked into a bf16 im2col scratch and
# the whole conv is a single (Cout, K) @ (K, L_pad) MXU matmul.
# --------------------------------------------------------------------------
def _make_kernel(cins_p, Cout, Nb, Wp, KH, KW, L_pad, left_shifts,
                 eps=EPS, neg_slope=NEG_SLOPE):
    n_in = len(cins_p)
    single_1x1 = (n_in == 1 and KH == 1 and KW == 1)

    def kernel(*refs):
        x_refs = refs[:n_in]
        w_ref, mw_ref, o_ref = refs[n_in:n_in + 3]
        col_ref = refs[n_in + 3]

        w = w_ref[...]            # (Cout, K) bf16
        mw = mw_ref[...]          # (1, L_pad) f32, value = 1/(H*W) at valid cols

        def one_sample(nb):
            if single_1x1:        # 1x1 conv: the input already IS the im2col
                cols = x_refs[0][nb, :, pl.ds(0, L_pad)]
            else:
                row = 0
                for j in range(n_in):
                    cinp = cins_p[j]
                    for kh in range(KH):
                        base = x_refs[j][nb, :, pl.ds(kh * Wp, L_pad)]
                        for kw in range(KW):
                            shift = left_shifts[kw]
                            tap = base if shift == 0 else pltpu.roll(
                                base, shift, axis=1)
                            col_ref[pl.ds(row, cinp), :] = tap
                            row += cinp
                cols = col_ref[...]
            # single bf16 MXU matmul, f32 accumulation
            acc = jnp.dot(w, cols, preferred_element_type=jnp.float32)
            # InstanceNorm (affine=False), one masked pass (review item 10).
            # Conv bias omitted: mean subtraction cancels any per-channel
            # constant exactly (valid only because IN is affine=False).
            am = acc * mw
            mean = jnp.sum(am, axis=1, keepdims=True)
            ex2 = jnp.sum(acc * am, axis=1, keepdims=True)
            var = ex2 - mean * mean
            y = (acc - mean) * lax.rsqrt(var + eps)
            if neg_slope != 1.0:                 # LeakyReLU(True) == identity
                y = jnp.where(y >= 0, y, neg_slope * y)
            o_ref[nb] = y

        if Nb == 1:
            one_sample(0)
        else:
            def body(nb, carry):                 # fori_loop bounds live ranges
                one_sample(nb)
                return carry
            lax.fori_loop(0, Nb, body, 0)

    return kernel


def conv_in_lrelu(xs, w, b):
    """Fused Conv2d('same', s=1) + InstanceNorm2d + LeakyReLU(1.0), Pallas.

    xs: list of activations [(N_j, Cin_j, H, W)].  Inputs with N_j < N are
        broadcast over the sample axis (sample s reads x_j[s // (N/N_j)]),
        which folds torch.repeat_interleave + channel-concat into the kernel
        via BlockSpec index_maps (never materialized in HBM).
    w : (Cout, sum_j Cin_j, KH, KW).  b: (Cout,) -- cancelled exactly by IN.
    """
    del b
    N = max(int(x.shape[0]) for x in xs)
    H, W = int(xs[0].shape[2]), int(xs[0].shape[3])
    Cout, Ctot, KH, KW = (int(d) for d in w.shape)
    assert Ctot == sum(int(x.shape[1]) for x in xs)
    ph, pw = KH // 2, KW // 2
    Hp, Wp = H + 2 * ph, W + 2 * pw
    T = KH * KW

    L = H * Wp                                     # flattened output span
    L_pad = _round_up(L + (KW - 1), 128)           # lane-dense + roll slack
    Lsrc_pad = _round_up((KH - 1) * Wp + L_pad, 128)

    cins = [int(x.shape[1]) for x in xs]
    cins_p = [_round_up(c, 16) for c in cins]      # bf16 sublane tile = 16
    K = T * sum(cins_p)

    ratios = [N // int(x.shape[0]) for x in xs]
    for x, r in zip(xs, ratios):
        assert int(x.shape[0]) * r == N
    mixed = any(r != 1 for r in ratios)

    # ---- VMEM budgeting & grid sizing (items 5/6/7) -------------------------
    in_bytes = sum(cp * Lsrc_pad * 2 for cp in cins_p)     # bf16, per sample
    out_bytes = Cout * L_pad * 4                           # f32, per sample
    per_sample = 2 * (in_bytes + out_bytes)                # double-buffered
    fixed = K * L_pad * 2 + 2 * (Cout * K * 2 + L_pad * 4)
    Nb = _pick_nb(N, per_sample, fixed, _vmem_budget_bytes(), mixed)
    Ng = -(-N // Nb)
    N_pad = Ng * Nb
    vmem_limit = int(min(64 * 2 ** 20,
                         max(32 * 2 ** 20, 4 * (fixed + Nb * per_sample))))

    # ---- glue (plain JAX, fused by the surrounding jit): flatten + pack -----
    mw = jnp.pad(jnp.full((H, W), 1.0 / (H * W), jnp.float32),
                 ((0, 0), (0, Wp - W))).reshape(1, L)
    mw = jnp.pad(mw, ((0, 0), (0, L_pad - L)))

    xs_flat = []
    for x, c, cp, r in zip(xs, cins, cins_p, ratios):
        nj_need = -(-N_pad // r)
        xj = jnp.pad(x.astype(jnp.float32),
                     ((0, nj_need - int(x.shape[0])), (0, cp - c),
                      (ph, ph), (pw, pw)))
        xj = xj.reshape(nj_need, cp, Hp * Wp)
        xj = jnp.pad(xj, ((0, 0), (0, 0), (0, Lsrc_pad - Hp * Wp)))
        xs_flat.append(xj.astype(jnp.bfloat16))

    # weights -> per-input blocks of (Cout, KH, KW, Cin_p) -> (Cout, K);
    # column order (input j, kh, kw, channel) matches the im2col row order.
    wblocks = []
    c0 = 0
    for c, cp in zip(cins, cins_p):
        wj = w[:, c0:c0 + c, :, :].astype(jnp.float32)
        wj = jnp.transpose(wj, (0, 2, 3, 1))
        wj = jnp.pad(wj, ((0, 0), (0, 0), (0, 0), (0, cp - c)))
        wblocks.append(wj.reshape(Cout, T * cp))
        c0 += c
    wt = jnp.concatenate(wblocks, axis=1).astype(jnp.bfloat16)   # (Cout, K)

    left_shifts = tuple(_left_shift_amount(kw, L_pad) for kw in range(KW))
    kernel = _make_kernel(tuple(cins_p), Cout, Nb, Wp, KH, KW, L_pad,
                          left_shifts)

    in_specs = []
    for cp, r in zip(cins_p, ratios):
        blk = Nb if r == 1 else 1
        in_specs.append(pl.BlockSpec((blk, cp, Lsrc_pad),
                                     (lambda n, _r=r: (n // _r, 0, 0))))
    in_specs += [pl.BlockSpec((Cout, K), lambda n: (0, 0)),
                 pl.BlockSpec((1, L_pad), lambda n: (0, 0))]

    out = pl.pallas_call(
        kernel,
        out_shape=jax.ShapeDtypeStruct((N_pad, Cout, L_pad), jnp.float32),
        grid_spec=pltpu.PrefetchScalarGridSpec(
            num_scalar_prefetch=0,
            grid=(Ng,),
            in_specs=in_specs,
            out_specs=pl.BlockSpec((Nb, Cout, L_pad), lambda n: (n, 0, 0)),
            scratch_shapes=[pltpu.VMEM((max(K, 16), L_pad), jnp.bfloat16)],
        ),
        compiler_params=pltpu.CompilerParams(
            dimension_semantics=("parallel",),
            vmem_limit_bytes=vmem_limit),
    )(*xs_flat, wt, mw)

    # glue: drop padding, un-flatten, strip spatial padding columns.
    out = out[:N, :, :L].reshape(N, Cout, H, Wp)
    return out[:, :, :, :W]


# --------------------------------------------------------------------------
# Pure-JAX reference of the same fused stage.  Conv operands are quantized to
# bf16 (exactly like the kernel's MXU path) with f32 accumulation, so the
# comparison validates layout / im2col / IN logic at the kernel's compute
# precision; the remaining delta vs a pure-f32 PyTorch run is the bf16
# rounding that InstanceNorm renders negligible.
# --------------------------------------------------------------------------
def conv_in_lrelu_ref(xs, w, b):
    N = max(int(x.shape[0]) for x in xs)
    parts = [x if int(x.shape[0]) == N
             else jnp.repeat(x, N // int(x.shape[0]), axis=0) for x in xs]
    x = jnp.concatenate(parts, axis=1).astype(jnp.float32)
    KH, KW = int(w.shape[2]), int(w.shape[3])
    xq = x.astype(jnp.bfloat16).astype(jnp.float32)
    wq = w.astype(jnp.float32).astype(jnp.bfloat16).astype(jnp.float32)
    out = lax.conv_general_dilated(
        xq, wq, window_strides=(1, 1),
        padding=((KH // 2, KH // 2), (KW // 2, KW // 2)),
        dimension_numbers=("NCHW", "OIHW", "NCHW"),
        precision=lax.Precision.HIGHEST)
    out = out + b[None, :, None, None]
    mean = jnp.mean(out, axis=(2, 3), keepdims=True)
    var = jnp.mean(jnp.square(out - mean), axis=(2, 3), keepdims=True)
    y = (out - mean) * lax.rsqrt(var + EPS)
    return jnp.where(y >= 0, y, NEG_SLOPE * y)     # identity for slope 1.0


# --------------------------------------------------------------------------
# pfrb_sig_block.forward, mirrored 1:1 (requires CH == num_fre, nbr == 1, as
# the PyTorch shapes do).  repeat_interleave + cat are expressed as
# multi-input conv calls; the Pallas path folds them into the kernels.
# --------------------------------------------------------------------------
def pfrb_sig_block_forward(x, params, conv_fn, num_represent=4,
                           num_base_represent=1):
    assert num_base_represent == 1
    B, CH, H, W = x.shape
    xu = x.reshape(B * CH, 1, H, W).astype(jnp.float32)
    # conv1: Conv2d(1 -> R) + IN + LeakyReLU(1.0)
    inpu1 = conv_fn([xu], params["conv1_w"], params["conv1_b"])
    # con_base: Conv2d(CH*R -> R, 1x1) + IN + LeakyReLU(1.0)
    cb_in = inpu1.reshape(B, CH * num_represent, H, W)
    base = conv_fn([cb_in], params["con_base_w"], params["con_base_b"])
    # conv2 over cat([repeat_interleave(base, CH), inpu1], dim=1)
    base2 = conv_fn([base, inpu1], params["conv2_w"], params["conv2_b"])
    # conv3 over cat([base2, xu], dim=1)
    out = conv_fn([base2, xu], params["conv3_w"], params["conv3_b"])
    return out.reshape(B, -1, H, W)


def init_params(key, in_ch=1, ou_ch=1, num_fre=4, num_represent=4,
                num_base_represent=1):
    R, nbr = num_represent, num_base_represent
    ks = jax.random.split(key, 8)

    def w_init(k, cout, cin, kh, kw):
        fan_in = cin * kh * kw
        return jax.random.normal(k, (cout, cin, kh, kw),
                                 jnp.float32) / jnp.sqrt(fan_in)

    def b_init(k, cout):
        return 0.1 * jax.random.normal(k, (cout,), jnp.float32)

    return {
        "conv1_w": w_init(ks[0], R * in_ch, in_ch, 3, 3),
        "conv1_b": b_init(ks[1], R * in_ch),
        "con_base_w": w_init(ks[2], R * in_ch * nbr, num_fre * R * in_ch, 1, 1),
        "con_base_b": b_init(ks[3], R * in_ch * nbr),
        "conv2_w": w_init(ks[4], in_ch * R, R * in_ch * (nbr + 1), 3, 3),
        "conv2_b": b_init(ks[5], in_ch * R),
        "conv3_w": w_init(ks[6], ou_ch, in_ch * (R + 1), 3, 3),
        "conv3_b": b_init(ks[7], ou_ch),
    }


if __name__ == "__main__":
    # Warm the pltpu.roll convention probe eagerly (must not run under jit).
    _roll_is_forward()

    root = jax.random.PRNGKey(0)
    k_x, k_p = jax.random.split(root)
    B, CH, H, W = 2, 4, 16, 16        # CH must equal num_fre for this module
    x = jax.random.normal(k_x, (B, CH, H, W), dtype=jnp.float32)
    params = init_params(k_p, num_fre=CH)

    fwd = jax.jit(pfrb_sig_block_forward, static_argnums=(2,))

    out = jax.block_until_ready(fwd(x, params, conv_in_lrelu))
    assert out.shape == (B, CH, H, W), out.shape
    assert bool(jnp.isfinite(out).all())

    ref = jax.block_until_ready(fwd(x, params, conv_in_lrelu_ref))
    max_err = float(jnp.max(jnp.abs(out - ref)))
    # Both paths use bf16 conv operands with f32 accumulation, so residual
    # differences are only summation order and the one-pass variance form.
    if max_err > 2e-2:
        raise AssertionError(f"Pallas vs reference mismatch: max |err| = {max_err}")
    print("KERNEL_OK")
</pallas_src>

<mosaic_0001>
module attributes {stable_mosaic.version = 11 : i64} {
  func.func @probe(%arg0: memref<8x128xi32, #tpu.memory_space<vmem>>, %arg1: memref<8x128xi32, #tpu.memory_space<vmem>>) attributes {dimension_semantics = [], scalar_prefetch = 0 : i64, scratch_operands = 0 : i64, tpu.core_type = #tpu.core_type<tc>} {
    %c0 = arith.constant 0 : index
    %c0_0 = arith.constant 0 : index
    %0 = vector.load %arg0[%c0, %c0_0] : memref<8x128xi32, #tpu.memory_space<vmem>>, vector<8x128xi32>
    %c1_i32 = arith.constant 1 : i32
    %1 = tpu.dynamic_rotate %0 by %c1_i32 dim 1 : vector<8x128xi32>, i32 -> vector<8x128xi32>
    %c0_1 = arith.constant 0 : index
    %c0_2 = arith.constant 0 : index
    %2 = vector.load %arg1[%c0_1, %c0_2] : memref<8x128xi32, #tpu.memory_space<vmem>>, vector<8x128xi32>
    tpu.vector_store %arg1[%c0_1, %c0_2], %1 {strides = array<i32>} : memref<8x128xi32, #tpu.memory_space<vmem>>, vector<8x128xi32>,
    return
  }
}

</mosaic_0001>

<llo_original>
// kernel: tpu_custom_call.1
$region0: #{tpu_custom_call.1}
  #allocation0 [shape = 'u32[]', space=smem, size = 0x4, offset = 0x4, fixed_abs, tag = 'smem constant byte address 0x4 - core index']
  #allocation1 [shape = 'u32[144,128]{1,0:T(1,128)}', space=vmem, size = 0x12000, scoped, tag = 'internal scratch']
  %s0 = inlined_call_operand.hbm [shape: s32[8,128], index: 0, kind: input, shape index: {}]
  %s1 = inlined_call_operand.hbm [shape: s32[8,128], index: 1, kind: output, shape index: {}]
  %s2 = sld [smem:[#allocation0]]
  $region18: #{tpu_custom_call.1} parent=0
    _
  %s4 = ssub.s32 1, %s2
  %s5 = scalar_select 0, %s4, %s2
  $region1: #{tpu_custom_call.1} parent=0
    #allocation2 [shape = 'u8[4096]{0}', space=vmem, size = 0x1000, scoped, tag = 'input window, operand 0, single buffered']
    #allocation3 [shape = 's32[1]{0}', space=sflag, size = 0x4, scoped, tag = 'scoped memory for tpu_custom_call.1']
    #allocation4 [shape = 's32[1]{0}', space=sflag, size = 0x4, scoped, tag = 'scoped memory for tpu_custom_call.1']
    #allocation5 [shape = 'u8[4096]{0}', space=vmem, size = 0x1000, scoped, tag = 'output window, operand 0, single buffered']
    %6 = vsyncpa [#allocation3], 0
    %7 = vsyncpa [#allocation4], 0
    // Predicated region
    $region2: #{tpu_custom_call.1} parent=1 // pred_check
      _
    $region3: #{tpu_custom_call.1} parent=1 // pred_check_branch
      %9 = sbr.rel (0) target = $region5
    $region4: #{tpu_custom_call.1} parent=1 // pred_region
      %s11 = ssub.s32 128, 128
      %12 = vsyncadd [#allocation3], %s11
      %s14 = sshll.u32 [#allocation2], 4
      %s15 = int_to_ptr.vmem [resolvable:$true] %s14
      %17 = dma.hbm_to_vmem [thread:$0]  %s0, 128, %s15, [#allocation3]
    $region5: #{tpu_custom_call.1} parent=1 // pred_fallthru
      _
    // Predicated region
    $region6: #{tpu_custom_call.1} parent=1 // pred_check
      _
    $region7: #{tpu_custom_call.1} parent=1 // pred_check_branch
      %19 = sbr.rel (0) target = $region9
    $region8: #{tpu_custom_call.1} parent=1 // pred_region
      %20 = dma.done [#allocation3], 128
    $region9: #{tpu_custom_call.1} parent=1 // pred_fallthru
      _
    %v21 = vld [vmem:[#allocation2] sm:$0xff]
    %22 = vrot.lane.b32.xlu0 %v21, 1
    %v23 = vpop.permute.xlu0 %22
    %24 = vst [vmem:[#allocation5] sm:$0xff] %v23
    // Predicated region
    $region10: #{tpu_custom_call.1} parent=1 // pred_check
      _
    $region11: #{tpu_custom_call.1} parent=1 // pred_check_branch
      %26 = sbr.rel (0) target = $region13
    $region12: #{tpu_custom_call.1} parent=1 // pred_region
      %s28 = ssub.s32 128, 128
      %29 = vsyncadd [#allocation4], %s28
      %s31 = sshll.u32 [#allocation5], 4
      %s32 = int_to_ptr.vmem [resolvable:$true] %s31
      %34 = dma.vmem_to_hbm [thread:$0]  %s32, 128, %s1, [#allocation4]
    $region13: #{tpu_custom_call.1} parent=1 // pred_fallthru
      _
    // Predicated region
    $region14: #{tpu_custom_call.1} parent=1 // pred_check
      _
    $region15: #{tpu_custom_call.1} parent=1 // pred_check_branch
      %36 = sbr.rel (0) target = $region17
    $region16: #{tpu_custom_call.1} parent=1 // pred_region
      %37 = dma.done [#allocation4], 128
    $region17: #{tpu_custom_call.1} parent=1 // pred_fallthru
      _
    %38 = vsyncpa [#allocation3], 1
    %39 = vsyncpa [#allocation4], 1

</llo_original>
